<compile_context>
chip_gen: v7x
topology: tpu7x:2x2x1
jax: 0.10.0
libtpu: 0.0.40
codegen_flags: <defaults>
</compile_context>

<pallas_src>
import jax
import jax.numpy as jnp
from jax import lax
from jax.experimental import pallas as pl
from jax.experimental.pallas import tpu as pltpu


def _round_up(x, m):
    return ((x + m - 1) // m) * m


# ---------------------------------------------------------------------------
# Kernel 1 (one-shot, tiny): per-token scalar LUT
#   tokval[0, v] = w2^T tanh(emb[v, :] @ W1 + b1)
# ---------------------------------------------------------------------------
def token_lut_kernel(emb_ref, w1_ref, b1_ref, w2_ref, tokval_ref):
    h = jnp.dot(emb_ref[...], w1_ref[...], preferred_element_type=jnp.float32)
    lut = jnp.tanh(h + b1_ref[...])                          # (VP, HP)
    # Contract H of the w2 row against H of the LUT -> lane-dense (1, VP).
    tokval_ref[...] = lax.dot_general(
        w2_ref[...], lut,
        dimension_numbers=(((1,), (1,)), ((), ())),
        preferred_element_type=jnp.float32)


# ---------------------------------------------------------------------------
# Kernel 2 (per batch tile):
#   counts[b, v] = #{s : x[b, s] == v}        (fused gather + set-sum, VPU)
#   out[0, b]    = sum_v counts[b, v] * tokval[v] + b2       (MXU, lane-dense)
# ---------------------------------------------------------------------------
def deepsets_sum_kernel(x_ref, tokval_ref, b2_ref, out_ref):
    idx = x_ref[...]                                         # (TB, S) int32
    tb, s_len = idx.shape
    vp = tokval_ref.shape[1]

    # Token-count histogram per set.  S is small & static, so a fully
    # unrolled loop of lane-broadcast compares; no 3-D intermediates.
    viota = lax.broadcasted_iota(jnp.int32, (tb, vp), 1)
    counts = jnp.zeros((tb, vp), jnp.float32)
    for s in range(s_len):
        counts = counts + (idx[:, s:s + 1] == viota).astype(jnp.float32)

    # (1, VP) x (TB, VP)^T -> (1, TB): result is already in the lane-dense
    # output block layout (no N=1 matmul, no transpose, no masked store).
    out = lax.dot_general(
        tokval_ref[...], counts,
        dimension_numbers=(((1,), (1,)), ((), ())),
        preferred_element_type=jnp.float32)
    out_ref[...] = out + b2_ref[...]


@jax.jit
def deepsets_forward(x, emb_table, w1, b1, w2, b2):
    """x: (B, S) int32 token indices. Returns (B,) float32."""
    B, S = x.shape
    V, E = emb_table.shape
    H = w1.shape[1]

    VP = _round_up(V, 128)
    EP = _round_up(E, 128)
    HP = _round_up(H, 128)
    TB = 512 if B >= 512 else 128          # batch tile (multiple of 128)
    B_pad = _round_up(B, TB)

    f32 = jnp.float32
    # Zero-padding is exact: padded E/H columns contribute 0 (w2 pad = 0),
    # padded vocab rows are never indexed, padded batch rows are sliced off.
    emb_p = jnp.zeros((VP, EP), f32).at[:V, :E].set(emb_table.astype(f32))
    w1_p = jnp.zeros((EP, HP), f32).at[:E, :H].set(w1.astype(f32))
    b1_p = jnp.zeros((1, HP), f32).at[0, :H].set(b1.astype(f32))
    w2_p = jnp.zeros((1, HP), f32).at[0, :H].set(w2.astype(f32)[:, 0])
    b2_p = b2.astype(f32).reshape(1, 1)
    x_p = jnp.zeros((B_pad, S), jnp.int32).at[:B].set(x.astype(jnp.int32))

    # --- Kernel 1: per-token scalar LUT (fc1 + tanh + fc2 weights folded) ---
    tokval = pl.pallas_call(
        token_lut_kernel,
        out_shape=jax.ShapeDtypeStruct((1, VP), f32),
        in_specs=[
            pl.BlockSpec((VP, EP), lambda: (0, 0)),
            pl.BlockSpec((EP, HP), lambda: (0, 0)),
            pl.BlockSpec((1, HP), lambda: (0, 0)),
            pl.BlockSpec((1, HP), lambda: (0, 0)),
        ],
        out_specs=pl.BlockSpec((1, VP), lambda: (0, 0)),
    )(emb_p, w1_p, b1_p, w2_p)

    # --- Kernel 2: fused gather + set-sum + fc2, tiled over batch -----------
    out = pl.pallas_call(
        deepsets_sum_kernel,
        out_shape=jax.ShapeDtypeStruct((1, B_pad), f32),
        grid=(B_pad // TB,),
        in_specs=[
            pl.BlockSpec((TB, S), lambda i: (i, 0)),      # token ids
            pl.BlockSpec((1, VP), lambda i: (0, 0)),      # tokval row (resident)
            pl.BlockSpec((1, 1), lambda i: (0, 0)),       # b2
        ],
        out_specs=pl.BlockSpec((1, TB), lambda i: (0, i)),
        compiler_params=pltpu.CompilerParams(
            dimension_semantics=("parallel",),            # megacore on v7x
            vmem_limit_bytes=32 * 1024 * 1024,
        ),
    )(x_p, tokval, b2_p)

    return out[0, :B]


def reference_forward(x, emb_table, w1, b1, w2, b2):
    x_emb = jnp.take(emb_table, x, axis=0)                        # (B, S, E)
    h = jnp.tanh(jnp.einsum("bse,eh->bsh", x_emb, w1) + b1)       # (B, S, H)
    agg = jnp.sum(h, axis=1)                                      # (B, H)
    return (agg @ w2 + b2).squeeze()


if __name__ == "__main__":
    # Small shapes consistent with the module's forward.
    input_dim = 10      # vocab size for the embedding
    embedding_dim = 16
    hidden_dim = 32
    B, S = 2, 8         # batch of 2 sets, 8 elements each

    key = jax.random.PRNGKey(0)
    k0, k1, k2, k3, k4, k5 = jax.random.split(key, 6)

    emb_table = jax.random.normal(k0, (input_dim, embedding_dim), jnp.float32) * 0.1
    w1 = jax.random.normal(k1, (embedding_dim, hidden_dim), jnp.float32) * 0.1
    b1 = jax.random.normal(k2, (hidden_dim,), jnp.float32) * 0.1
    w2 = jax.random.normal(k3, (hidden_dim, 1), jnp.float32) * 0.1
    b2 = jax.random.normal(k4, (1,), jnp.float32) * 0.1

    x = jax.random.randint(k5, (B, S), 0, input_dim, dtype=jnp.int32)

    out = jax.block_until_ready(deepsets_forward(x, emb_table, w1, b1, w2, b2))
    ref = jax.block_until_ready(reference_forward(x, emb_table, w1, b1, w2, b2))

    assert out.shape == (B,), f"bad output shape {out.shape}"
    assert jnp.allclose(out, ref, atol=1e-5, rtol=1e-5), (out, ref)
    print("KERNEL_OK")
</pallas_src>

<mosaic_0001>
module attributes {stable_mosaic.version = 11 : i64} {
  func.func @deepsets_sum_kernel(%arg0: i32, %arg1: memref<128x8xi32, #tpu.memory_space<vmem>>, %arg2: memref<1x128xf32, #tpu.memory_space<vmem>>, %arg3: memref<1x1xf32, #tpu.memory_space<vmem>>, %arg4: memref<1x128xf32, #tpu.memory_space<vmem>>) attributes {dimension_semantics = [#tpu.dimension_semantics<parallel>], iteration_bounds = array<i64: 1>, scalar_prefetch = 0 : i64, scratch_operands = 0 : i64, tpu.core_type = #tpu.core_type<tc>, window_params = [{transform_indices = @transform_0, window_bounds = array<i64: 128, 8>}, {pipeline_mode = #tpu.pipeline_mode<synchronous>, transform_indices = @transform_1, window_bounds = array<i64: 1, 128>}, {pipeline_mode = #tpu.pipeline_mode<synchronous>, transform_indices = @transform_2, window_bounds = array<i64: 1, 1>}, {transform_indices = @transform_3, window_bounds = array<i64: 1, 128>}]} {
    %c0 = arith.constant 0 : index
    %c0_0 = arith.constant 0 : index
    %0 = vector.load %arg1[%c0, %c0_0] : memref<128x8xi32, #tpu.memory_space<vmem>>, vector<128x8xi32>
    %1 = tpu.iota {dimensions = array<i32: 1>} : vector<128x128xi32>
    %cst = arith.constant 0.000000e+00 : f32
    %2 = vector.broadcast %cst : f32 to vector<128x128xf32>
    %3 = vector.extract_strided_slice %0 {offsets = [0, 0], sizes = [128, 1], strides = [1, 1]} : vector<128x8xi32> to vector<128x1xi32>
    %4 = vector.broadcast %3 : vector<128x1xi32> to vector<128x128xi32>
    %5 = arith.cmpi eq, %4, %1 : vector<128x128xi32>
    %6 = arith.extui %5 : vector<128x128xi1> to vector<128x128xi32>
    %7 = arith.sitofp %6 : vector<128x128xi32> to vector<128x128xf32>
    %8 = arith.addf %2, %7 : vector<128x128xf32>
    %9 = vector.extract_strided_slice %0 {offsets = [0, 1], sizes = [128, 1], strides = [1, 1]} : vector<128x8xi32> to vector<128x1xi32>
    %10 = vector.broadcast %9 : vector<128x1xi32> to vector<128x128xi32>
    %11 = arith.cmpi eq, %10, %1 : vector<128x128xi32>
    %12 = arith.extui %11 : vector<128x128xi1> to vector<128x128xi32>
    %13 = arith.sitofp %12 : vector<128x128xi32> to vector<128x128xf32>
    %14 = arith.addf %8, %13 : vector<128x128xf32>
    %15 = vector.extract_strided_slice %0 {offsets = [0, 2], sizes = [128, 1], strides = [1, 1]} : vector<128x8xi32> to vector<128x1xi32>
    %16 = vector.broadcast %15 : vector<128x1xi32> to vector<128x128xi32>
    %17 = arith.cmpi eq, %16, %1 : vector<128x128xi32>
    %18 = arith.extui %17 : vector<128x128xi1> to vector<128x128xi32>
    %19 = arith.sitofp %18 : vector<128x128xi32> to vector<128x128xf32>
    %20 = arith.addf %14, %19 : vector<128x128xf32>
    %21 = vector.extract_strided_slice %0 {offsets = [0, 3], sizes = [128, 1], strides = [1, 1]} : vector<128x8xi32> to vector<128x1xi32>
    %22 = vector.broadcast %21 : vector<128x1xi32> to vector<128x128xi32>
    %23 = arith.cmpi eq, %22, %1 : vector<128x128xi32>
    %24 = arith.extui %23 : vector<128x128xi1> to vector<128x128xi32>
    %25 = arith.sitofp %24 : vector<128x128xi32> to vector<128x128xf32>
    %26 = arith.addf %20, %25 : vector<128x128xf32>
    %27 = vector.extract_strided_slice %0 {offsets = [0, 4], sizes = [128, 1], strides = [1, 1]} : vector<128x8xi32> to vector<128x1xi32>
    %28 = vector.broadcast %27 : vector<128x1xi32> to vector<128x128xi32>
    %29 = arith.cmpi eq, %28, %1 : vector<128x128xi32>
    %30 = arith.extui %29 : vector<128x128xi1> to vector<128x128xi32>
    %31 = arith.sitofp %30 : vector<128x128xi32> to vector<128x128xf32>
    %32 = arith.addf %26, %31 : vector<128x128xf32>
    %33 = vector.extract_strided_slice %0 {offsets = [0, 5], sizes = [128, 1], strides = [1, 1]} : vector<128x8xi32> to vector<128x1xi32>
    %34 = vector.broadcast %33 : vector<128x1xi32> to vector<128x128xi32>
    %35 = arith.cmpi eq, %34, %1 : vector<128x128xi32>
    %36 = arith.extui %35 : vector<128x128xi1> to vector<128x128xi32>
    %37 = arith.sitofp %36 : vector<128x128xi32> to vector<128x128xf32>
    %38 = arith.addf %32, %37 : vector<128x128xf32>
    %39 = vector.extract_strided_slice %0 {offsets = [0, 6], sizes = [128, 1], strides = [1, 1]} : vector<128x8xi32> to vector<128x1xi32>
    %40 = vector.broadcast %39 : vector<128x1xi32> to vector<128x128xi32>
    %41 = arith.cmpi eq, %40, %1 : vector<128x128xi32>
    %42 = arith.extui %41 : vector<128x128xi1> to vector<128x128xi32>
    %43 = arith.sitofp %42 : vector<128x128xi32> to vector<128x128xf32>
    %44 = arith.addf %38, %43 : vector<128x128xf32>
    %45 = vector.extract_strided_slice %0 {offsets = [0, 7], sizes = [128, 1], strides = [1, 1]} : vector<128x8xi32> to vector<128x1xi32>
    %46 = vector.broadcast %45 : vector<128x1xi32> to vector<128x128xi32>
    %47 = arith.cmpi eq, %46, %1 : vector<128x128xi32>
    %48 = arith.extui %47 : vector<128x128xi1> to vector<128x128xi32>
    %49 = arith.sitofp %48 : vector<128x128xi32> to vector<128x128xf32>
    %50 = arith.addf %44, %49 : vector<128x128xf32>
    %c0_1 = arith.constant 0 : index
    %c0_2 = arith.constant 0 : index
    %51 = vector.load %arg2[%c0_1, %c0_2] : memref<1x128xf32, #tpu.memory_space<vmem>>, vector<1x128xf32>
    %cst_3 = arith.constant dense<0.000000e+00> : vector<1x128xf32>
    %52 = tpu.matmul %51, %50, %cst_3 {dimension_numbers = #tpu.dot_dimension_numbers<[1], [1], [0], [0], [0, 0, 1, 0], [], []>} : vector<1x128xf32>, vector<128x128xf32>, vector<1x128xf32> -> vector<1x128xf32>
    %c0_4 = arith.constant 0 : index
    %c0_5 = arith.constant 0 : index
    %53 = vector.load %arg3[%c0_4, %c0_5] : memref<1x1xf32, #tpu.memory_space<vmem>>, vector<1x1xf32>
    %54 = vector.broadcast %53 : vector<1x1xf32> to vector<1x128xf32>
    %55 = arith.addf %52, %54 : vector<1x128xf32>
    %c0_6 = arith.constant 0 : index
    %c0_7 = arith.constant 0 : index
    %56 = vector.load %arg4[%c0_6, %c0_7] : memref<1x128xf32, #tpu.memory_space<vmem>>, vector<1x128xf32>
    tpu.vector_store %arg4[%c0_6, %c0_7], %55 {strides = array<i32>} : memref<1x128xf32, #tpu.memory_space<vmem>>, vector<1x128xf32>,
    return
  }
  func.func @transform_0(%arg0: i32) -> (i32, i32) {
    %c0_i32 = arith.constant 0 : i32
    %c0_i32_0 = arith.constant 0 : i32
    return %arg0, %c0_i32 : i32, i32
  }
  func.func @transform_1(%arg0: i32) -> (i32, i32) {
    %c0_i32 = arith.constant 0 : i32
    %c0_i32_0 = arith.constant 0 : i32
    %c0_i32_1 = arith.constant 0 : i32
    return %c0_i32, %c0_i32_0 : i32, i32
  }
  func.func @transform_2(%arg0: i32) -> (i32, i32) {
    %c0_i32 = arith.constant 0 : i32
    %c0_i32_0 = arith.constant 0 : i32
    %c0_i32_1 = arith.constant 0 : i32
    return %c0_i32, %c0_i32_0 : i32, i32
  }
  func.func @transform_3(%arg0: i32) -> (i32, i32) {
    %c0_i32 = arith.constant 0 : i32
    %c0_i32_0 = arith.constant 0 : i32
    return %c0_i32, %arg0 : i32, i32
  }
}

module attributes {stable_mosaic.version = 11 : i64} {
  func.func @token_lut_kernel(%arg0: memref<128x128xf32, #tpu.memory_space<vmem>>, %arg1: memref<128x128xf32, #tpu.memory_space<vmem>>, %arg2: memref<1x128xf32, #tpu.memory_space<vmem>>, %arg3: memref<1x128xf32, #tpu.memory_space<vmem>>, %arg4: memref<1x128xf32, #tpu.memory_space<vmem>>) attributes {dimension_semantics = [], scalar_prefetch = 0 : i64, scratch_operands = 0 : i64, tpu.core_type = #tpu.core_type<tc>} {
    %c0 = arith.constant 0 : index
    %c0_0 = arith.constant 0 : index
    %0 = vector.load %arg0[%c0, %c0_0] : memref<128x128xf32, #tpu.memory_space<vmem>>, vector<128x128xf32>
    %c0_1 = arith.constant 0 : index
    %c0_2 = arith.constant 0 : index
    %1 = vector.load %arg1[%c0_1, %c0_2] : memref<128x128xf32, #tpu.memory_space<vmem>>, vector<128x128xf32>
    %cst = arith.constant dense<0.000000e+00> : vector<128x128xf32>
    %2 = tpu.matmul %0, %1, %cst {dimension_numbers = #tpu.dot_dimension_numbers<[1], [0], [0], [1], [0, 0, 1, 1], [], []>} : vector<128x128xf32>, vector<128x128xf32>, vector<128x128xf32> -> vector<128x128xf32>
    %c0_3 = arith.constant 0 : index
    %c0_4 = arith.constant 0 : index
    %3 = vector.load %arg2[%c0_3, %c0_4] : memref<1x128xf32, #tpu.memory_space<vmem>>, vector<1x128xf32>
    %4 = vector.broadcast %3 : vector<1x128xf32> to vector<128x128xf32>
    %5 = arith.addf %2, %4 : vector<128x128xf32>
    %6 = math.tanh %5 : vector<128x128xf32>
    %c0_5 = arith.constant 0 : index
    %c0_6 = arith.constant 0 : index
    %7 = vector.load %arg3[%c0_5, %c0_6] : memref<1x128xf32, #tpu.memory_space<vmem>>, vector<1x128xf32>
    %cst_7 = arith.constant dense<0.000000e+00> : vector<1x128xf32>
    %8 = tpu.matmul %7, %6, %cst_7 {dimension_numbers = #tpu.dot_dimension_numbers<[1], [1], [0], [0], [0, 0, 1, 0], [], []>} : vector<1x128xf32>, vector<128x128xf32>, vector<1x128xf32> -> vector<1x128xf32>
    %c0_8 = arith.constant 0 : index
    %c0_9 = arith.constant 0 : index
    %9 = vector.load %arg4[%c0_8, %c0_9] : memref<1x128xf32, #tpu.memory_space<vmem>>, vector<1x128xf32>
    tpu.vector_store %arg4[%c0_8, %c0_9], %8 {strides = array<i32>} : memref<1x128xf32, #tpu.memory_space<vmem>>, vector<1x128xf32>,
    return
  }
}

</mosaic_0001>

<llo_original>
// kernel: deepsets_forward.2
$region0: #{deepsets_forward.2}
  #allocation0 [shape = 'u32[]', space=smem, size = 0x4, offset = 0x4, fixed_abs, tag = 'smem constant byte address 0x4 - core index']
  #allocation1 [shape = 'u32[144,128]{1,0:T(1,128)}', space=vmem, size = 0x12000, scoped, tag = 'internal scratch']
  %s0 = inlined_call_operand.vmem [shape: f32[128,128], index: 0, kind: input, shape index: {}]
  %s1 = inlined_call_operand.vmem [shape: f32[128,128], index: 1, kind: input, shape index: {}]
  %s2 = inlined_call_operand.vmem [shape: f32[1,128], index: 2, kind: input, shape index: {}]
  %s3 = inlined_call_operand.vmem [shape: f32[1,128], index: 3, kind: input, shape index: {}]
  %s4 = inlined_call_operand.vmem [shape: f32[1,128], index: 4, kind: output, shape index: {}]
  %s5 = sld [smem:[#allocation0]]
  $region26: #{deepsets_forward.2} parent=0
    _
  %s7 = ssub.s32 1, %s5
  %s8 = scalar_select 0, %s7, %s5
  // Predicated region
  $region2: #{deepsets_forward.2} parent=0 // pred_check
    _
  $region3: #{deepsets_forward.2} parent=0 // pred_check_branch
    %10 = sbr.rel (0) target = $region5
  $region4: #{deepsets_forward.2} parent=0 // pred_region
    _
  $region5: #{deepsets_forward.2} parent=0 // pred_fallthru
    _
  // Predicated region
  $region6: #{deepsets_forward.2} parent=0 // pred_check
    _
  $region7: #{deepsets_forward.2} parent=0 // pred_check_branch
    %12 = sbr.rel (0) target = $region9
  $region8: #{deepsets_forward.2} parent=0 // pred_region
    _
  $region9: #{deepsets_forward.2} parent=0 // pred_fallthru
    _
  // Predicated region
  $region10: #{deepsets_forward.2} parent=0 // pred_check
    _
  $region11: #{deepsets_forward.2} parent=0 // pred_check_branch
    %14 = sbr.rel (0) target = $region13
  $region12: #{deepsets_forward.2} parent=0 // pred_region
    _
  $region13: #{deepsets_forward.2} parent=0 // pred_fallthru
    _
  // Predicated region
  $region14: #{deepsets_forward.2} parent=0 // pred_check
    _
  $region15: #{deepsets_forward.2} parent=0 // pred_check_branch
    %16 = sbr.rel (0) target = $region17
  $region16: #{deepsets_forward.2} parent=0 // pred_region
    _
  $region17: #{deepsets_forward.2} parent=0 // pred_fallthru
    _
  %v17 = vld [vmem:[%s0] sm:$0xff]
  %v18 = vld [vmem:[%s0 + $0x8] sm:$0xff]
  %v19 = vld [vmem:[%s0 + $0x10] sm:$0xff]
  %v20 = vld [vmem:[%s0 + $0x18] sm:$0xff]
  %v21 = vld [vmem:[%s0 + $0x20] sm:$0xff]
  %v22 = vld [vmem:[%s0 + $0x28] sm:$0xff]
  %v23 = vld [vmem:[%s0 + $0x30] sm:$0xff]
  %v24 = vld [vmem:[%s0 + $0x38] sm:$0xff]
  %v25 = vld [vmem:[%s0 + $0x40] sm:$0xff]
  %v26 = vld [vmem:[%s0 + $0x48] sm:$0xff]
  %v27 = vld [vmem:[%s0 + $0x50] sm:$0xff]
  %v28 = vld [vmem:[%s0 + $0x58] sm:$0xff]
  %v29 = vld [vmem:[%s0 + $0x60] sm:$0xff]
  %v30 = vld [vmem:[%s0 + $0x68] sm:$0xff]
  %v31 = vld [vmem:[%s0 + $0x70] sm:$0xff]
  %v32 = vld [vmem:[%s0 + $0x78] sm:$0xff]
  %v33 = vld [vmem:[%s1] sm:$0xff]
  %v34 = vld [vmem:[%s1 + $0x8] sm:$0xff]
  %v35 = vld [vmem:[%s1 + $0x10] sm:$0xff]
  %v36 = vld [vmem:[%s1 + $0x18] sm:$0xff]
  %v37 = vld [vmem:[%s1 + $0x20] sm:$0xff]
  %v38 = vld [vmem:[%s1 + $0x28] sm:$0xff]
  %v39 = vld [vmem:[%s1 + $0x30] sm:$0xff]
  %v40 = vld [vmem:[%s1 + $0x38] sm:$0xff]
  %v41 = vld [vmem:[%s1 + $0x40] sm:$0xff]
  %v42 = vld [vmem:[%s1 + $0x48] sm:$0xff]
  %v43 = vld [vmem:[%s1 + $0x50] sm:$0xff]
  %v44 = vld [vmem:[%s1 + $0x58] sm:$0xff]
  %v45 = vld [vmem:[%s1 + $0x60] sm:$0xff]
  %v46 = vld [vmem:[%s1 + $0x68] sm:$0xff]
  %v47 = vld [vmem:[%s1 + $0x70] sm:$0xff]
  %v48 = vld [vmem:[%s1 + $0x78] sm:$0xff]
  %v49 = vld [vmem:[%s2] sm:$0x1]
  %v51 = vlaneseq
  %v52 = vshrl.u32 %v51, 7
  %v53 = vsub.s32 0, %v52
  %v54 = vrot.slane %v49, %v53
  %56 = vmatprep.subr.mxu0 0.0
  %57 = vmatpush1.msra.mxu0 %v33
  %58 = vmatprep.subr.mxu0 0.0
  %59 = vmatpush1.msra.mxu0 %v34
  %60 = vmatprep.subr.mxu0 0.0
  %61 = vmatpush1.msra.mxu0 %v35
  %62 = vmatprep.subr.mxu0 0.0
  %63 = vmatpush1.msra.mxu0 %v36
  %64 = vmatprep.subr.mxu0 0.0
  %65 = vmatpush1.msra.mxu0 %v37
  %66 = vmatprep.subr.mxu0 0.0
  %67 = vmatpush1.msra.mxu0 %v38
  %68 = vmatprep.subr.mxu0 0.0
  %69 = vmatpush1.msra.mxu0 %v39
  %70 = vmatprep.subr.mxu0 0.0
  %71 = vmatpush1.msra.mxu0 %v40
  %72 = vmatprep.subr.mxu0 0.0
  %73 = vmatpush1.msra.mxu0 %v41
  %74 = vmatprep.subr.mxu0 0.0
  %75 = vmatpush1.msra.mxu0 %v42
  %76 = vmatprep.subr.mxu0 0.0
  %77 = vmatpush1.msra.mxu0 %v43
  %78 = vmatprep.subr.mxu0 0.0
  %79 = vmatpush1.msra.mxu0 %v44
  %80 = vmatprep.subr.mxu0 0.0
  %81 = vmatpush1.msra.mxu0 %v45
  %82 = vmatprep.subr.mxu0 0.0
  %83 = vmatpush1.msra.mxu0 %v46
  %84 = vmatprep.subr.mxu0 0.0
  %85 = vmatpush1.msra.mxu0 %v47
  %86 = vmatprep.subr.mxu0 0.0
  %87 = vmatpush1.msra.mxu0 %v48
  %88 = vmatprep.subr.mxu0 0.0
  %89 = vmatpush1.msra.mxu0 0.0
  %90 = vmatprep.subr.mxu0 0.0
  %91 = vmatpush1.msra.mxu0 0.0
  %92 = vmatprep.subr.mxu0 0.0
  %93 = vmatpush1.msra.mxu0 0.0
  %94 = vmatprep.subr.mxu0 0.0
  %95 = vmatpush1.msra.mxu0 0.0
  %96 = vmatprep.subr.mxu0 0.0
  %97 = vmatpush1.msra.mxu0 0.0
  %98 = vmatprep.subr.mxu0 0.0
  %99 = vmatpush1.msra.mxu0 0.0
  %100 = vmatprep.subr.mxu0 0.0
  %101 = vmatpush1.msra.mxu0 0.0
  %102 = vmatprep.subr.mxu0 0.0
  %103 = vmatpush1.msra.mxu0 0.0
  %104 = vmatprep.subr.mxu0 0.0
  %105 = vmatpush1.msra.mxu0 0.0
  %106 = vmatprep.subr.mxu0 0.0
  %107 = vmatpush1.msra.mxu0 0.0
  %108 = vmatprep.subr.mxu0 0.0
  %109 = vmatpush1.msra.mxu0 0.0
  %110 = vmatprep.subr.mxu0 0.0
  %111 = vmatpush1.msra.mxu0 0.0
  %112 = vmatprep.subr.mxu0 0.0
  %113 = vmatpush1.msra.mxu0 0.0
  %114 = vmatprep.subr.mxu0 0.0
  %115 = vmatpush1.msra.mxu0 0.0
  %116 = vmatprep.subr.mxu0 0.0
  %117 = vmatpush1.msra.mxu0 0.0
  %118 = vmatprep.subr.mxu0 0.0
  %119 = vmatpush1.msra.mxu0 0.0
  %120 = vmatprep.mubr.f32.mxu0 0.0
  %121 = vmatmul.mubr.f32.gmra.mrb[0].mxu0 %v17
  %v122 = vpop.f32.mrb[0].mxu0
  %v123 = vadd.f32 %v54, %v122
  %v124 = vpop.f32.mrb[0].mxu0
  %125 = vmatprep.mubr.f32.mxu0 0.0
  %126 = vmatmul.mubr.f32.gmra.mrb[0].mxu0 %v18
  %v127 = vpop.f32.mrb[0].mxu0
  %v128 = vadd.f32 %v54, %v127
  %v129 = vpop.f32.mrb[0].mxu0
  %130 = vmatprep.mubr.f32.mxu0 0.0
  %131 = vmatmul.mubr.f32.gmra.mrb[0].mxu0 %v19
  %v132 = vpop.f32.mrb[0].mxu0
  %v133 = vadd.f32 %v54, %v132
  %v134 = vpop.f32.mrb[0].mxu0
  %135 = vmatprep.mubr.f32.mxu0 0.0
  %136 = vmatmul.mubr.f32.gmra.mrb[0].mxu0 %v20
  %v137 = vpop.f32.mrb[0].mxu0
  %v138 = vadd.f32 %v54, %v137
  %v139 = vpop.f32.mrb[0].mxu0
  %140 = vmatprep.mubr.f32.mxu0 0.0
  %141 = vmatmul.mubr.f32.gmra.mrb[0].mxu0 %v21
  %v142 = vpop.f32.mrb[0].mxu0
  %v143 = vadd.f32 %v54, %v142
  %v144 = vpop.f32.mrb[0].mxu0
  %145 = vmatprep.mubr.f32.mxu0 0.0
  %146 = vmatmul.mubr.f32.gmra.mrb[0].mxu0 %v22
  %v147 = vpop.f32.mrb[0].mxu0
  %v148 = vadd.f32 %v54, %v147
  %v149 = vpop.f32.mrb[0].mxu0
  %150 = vmatprep.mubr.f32.mxu0 0.0
  %151 = vmatmul.mubr.f32.gmra.mrb[0].mxu0 %v23
  %v152 = vpop.f32.mrb[0].mxu0
  %v153 = vadd.f32 %v54, %v152
  %v154 = vpop.f32.mrb[0].mxu0
  %155 = vmatprep.mubr.f32.mxu0 0.0
  %156 = vmatmul.mubr.f32.gmra.mrb[0].mxu0 %v24
  %v157 = vpop.f32.mrb[0].mxu0
  %v158 = vadd.f32 %v54, %v157
  %v159 = vpop.f32.mrb[0].mxu0
  %160 = vmatprep.mubr.f32.mxu0 0.0
  %161 = vmatmul.mubr.f32.gmra.mrb[0].mxu0 %v25
  %v162 = vpop.f32.mrb[0].mxu0
  %v163 = vadd.f32 %v54, %v162
  %v164 = vpop.f32.mrb[0].mxu0
  %165 = vmatprep.mubr.f32.mxu0 0.0
  %166 = vmatmul.mubr.f32.gmra.mrb[0].mxu0 %v26
  %v167 = vpop.f32.mrb[0].mxu0
  %v168 = vadd.f32 %v54, %v167
  %v169 = vpop.f32.mrb[0].mxu0
  %170 = vmatprep.mubr.f32.mxu0 0.0
  %171 = vmatmul.mubr.f32.gmra.mrb[0].mxu0 %v27
  %v172 = vpop.f32.mrb[0].mxu0
  %v173 = vadd.f32 %v54, %v172
  %v174 = vpop.f32.mrb[0].mxu0
  %175 = vmatprep.mubr.f32.mxu0 0.0
  %176 = vmatmul.mubr.f32.gmra.mrb[0].mxu0 %v28
  %v177 = vpop.f32.mrb[0].mxu0
  %v178 = vadd.f32 %v54, %v177
  %v179 = vpop.f32.mrb[0].mxu0
  %180 = vmatprep.mubr.f32.mxu0 0.0
  %181 = vmatmul.mubr.f32.gmra.mrb[0].mxu0 %v29
  %v182 = vpop.f32.mrb[0].mxu0
  %v183 = vadd.f32 %v54, %v182
  %v184 = vpop.f32.mrb[0].mxu0
  %185 = vmatprep.mubr.f32.mxu0 0.0
  %186 = vmatmul.mubr.f32.gmra.mrb[0].mxu0 %v30
  %v187 = vpop.f32.mrb[0].mxu0
  %v188 = vadd.f32 %v54, %v187
  %v189 = vpop.f32.mrb[0].mxu0
  %190 = vmatprep.mubr.f32.mxu0 0.0
  %191 = vmatmul.mubr.f32.gmra.mrb[0].mxu0 %v31
  %v192 = vpop.f32.mrb[0].mxu0
  %v193 = vadd.f32 %v54, %v192
  %v194 = vpop.f32.mrb[0].mxu0
  %195 = vmatprep.mubr.f32.mxu0 0.0
  %196 = vmatmul.mubr.f32.gmra.mrb[0].mxu0 %v32
  %v197 = vpop.f32.mrb[0].mxu0
  %v198 = vadd.f32 %v54, %v197
  %v199 = vpop.f32.mrb[0].mxu0
  %200 = vdwg.mxu0
  %v201 = vtanh.pop %v123
  %v202 = vtanh.pop %v128
  %v203 = vtanh.pop %v133
  %v204 = vtanh.pop %v138
  %v205 = vtanh.pop %v143
  %v206 = vtanh.pop %v148
  %v207 = vtanh.pop %v153
  %v208 = vtanh.pop %v158
  %v209 = vtanh.pop %v163
  %v210 = vtanh.pop %v168
  %v211 = vtanh.pop %v173
  %v212 = vtanh.pop %v178
  %v213 = vtanh.pop %v183
  %v214 = vtanh.pop %v188
  %v215 = vtanh.pop %v193
  %v216 = vtanh.pop %v198
  %v217 = vld [vmem:[%s3] sm:$0x1]
  %218 = vmatprep.subr.mxu0 0.0
  %219 = vmatpush1.xpose.msra.mxu0 %v201
  %220 = vmatprep.subr.mxu0 0.0
  %221 = vmatpush1.xpose.msra.mxu0 %v202
  %222 = vmatprep.subr.mxu0 0.0
  %223 = vmatpush1.xpose.msra.mxu0 %v203
  %224 = vmatprep.subr.mxu0 0.0
  %225 = vmatpush1.xpose.msra.mxu0 %v204
  %226 = vmatprep.subr.mxu0 0.0
  %227 = vmatpush1.xpose.msra.mxu0 %v205
  %228 = vmatprep.subr.mxu0 0.0
  %229 = vmatpush1.xpose.msra.mxu0 %v206
  %230 = vmatprep.subr.mxu0 0.0
  %231 = vmatpush1.xpose.msra.mxu0 %v207
  %232 = vmatprep.subr.mxu0 0.0
  %233 = vmatpush1.xpose.msra.mxu0 %v208
  %234 = vmatprep.subr.mxu0 0.0
  %235 = vmatpush1.xpose.msra.mxu0 %v209
  %236 = vmatprep.subr.mxu0 0.0
  %237 = vmatpush1.xpose.msra.mxu0 %v210
  %238 = vmatprep.subr.mxu0 0.0
  %239 = vmatpush1.xpose.msra.mxu0 %v211
  %240 = vmatprep.subr.mxu0 0.0
  %241 = vmatpush1.xpose.msra.mxu0 %v212
  %242 = vmatprep.subr.mxu0 0.0
  %243 = vmatpush1.xpose.msra.mxu0 %v213
  %244 = vmatprep.subr.mxu0 0.0
  %245 = vmatpush1.xpose.msra.mxu0 %v214
  %246 = vmatprep.subr.mxu0 0.0
  %247 = vmatpush1.xpose.msra.mxu0 %v215
  %248 = vmatprep.subr.mxu0 0.0
  %249 = vmatpush1.xpose.msra.mxu0 %v216
  %250 = vmatprep.subr.mxu0 0.0
  %251 = vmatpush1.xpose.msra.mxu0 0.0
  %252 = vmatprep.subr.mxu0 0.0
  %253 = vmatpush1.xpose.msra.mxu0 0.0
  %254 = vmatprep.subr.mxu0 0.0
  %255 = vmatpush1.xpose.msra.mxu0 0.0
  %256 = vmatprep.subr.mxu0 0.0
  %257 = vmatpush1.xpose.msra.mxu0 0.0
  %258 = vmatprep.subr.mxu0 0.0
  %259 = vmatpush1.xpose.msra.mxu0 0.0
  %260 = vmatprep.subr.mxu0 0.0
  %261 = vmatpush1.xpose.msra.mxu0 0.0
  %262 = vmatprep.subr.mxu0 0.0
  %263 = vmatpush1.xpose.msra.mxu0 0.0
  %264 = vmatprep.subr.mxu0 0.0
  %265 = vmatpush1.xpose.msra.mxu0 0.0
  %266 = vmatprep.subr.mxu0 0.0
  %267 = vmatpush1.xpose.msra.mxu0 0.0
  %268 = vmatprep.subr.mxu0 0.0
  %269 = vmatpush1.xpose.msra.mxu0 0.0
  %270 = vmatprep.subr.mxu0 0.0
  %271 = vmatpush1.xpose.msra.mxu0 0.0
  %272 = vmatprep.subr.mxu0 0.0
  %273 = vmatpush1.xpose.msra.mxu0 0.0
  %274 = vmatprep.subr.mxu0 0.0
  %275 = vmatpush1.xpose.msra.mxu0 0.0
  %276 = vmatprep.subr.mxu0 0.0
  %277 = vmatpush1.xpose.msra.mxu0 0.0
  %278 = vmatprep.subr.mxu0 0.0
  %279 = vmatpush1.xpose.msra.mxu0 0.0
  %280 = vmatprep.subr.mxu0 0.0
  %281 = vmatpush1.xpose.msra.mxu0 0.0
  %282 = vmatprep.mubr.f32.mxu0 0.0
  %283 = vmatmul.mubr.f32.gmra.mrb[0].mxu0 %v217
  %v284 = vpop.f32.mrb[0].mxu0
  %v285 = vadd.f32 0.0, %v284
  %v286 = vpop.f32.mrb[0].mxu0
  %287 = vdwg.mxu0
  %288 = vst [vmem:[%s4] sm:$0x1] %v285
  // Predicated region
  $region18: #{deepsets_forward.2} parent=0 // pred_check
    _
  $region19: #{deepsets_forward.2} parent=0 // pred_check_branch
    %290 = sbr.rel (0) target = $region21
  $region20: #{deepsets_forward.2} parent=0 // pred_region
    _
  $region21: #{deepsets_forward.2} parent=0 // pred_fallthru
    _
  // Predicated region
  $region22: #{deepsets_forward.2} parent=0 // pred_check
    _
  $region23: #{deepsets_forward.2} parent=0 // pred_check_branch
    %292 = sbr.rel (0) target = $region25
  $region24: #{deepsets_forward.2} parent=0 // pred_region
    _
  $region25: #{deepsets_forward.2} parent=0 // pred_fallthru
    _

// kernel: deepsets_forward.3
$region0: #{deepsets_forward.3}
  #allocation0 [shape = 'u32[]', space=smem, size = 0x4, offset = 0x4, fixed_abs, tag = 'smem constant byte address 0x4 - core index']
  #allocation1 [shape = 'u32[144,128]{1,0:T(1,128)}', space=vmem, size = 0x12000, scoped, tag = 'internal scratch']
  #allocation2 [shape = 'f32[1,1]{1,0:T(1,128)S(1)}', space=vmem, size = 0x200, scoped, tag = 'scoped memory for deepsets_forward.3']
  %s0 = inlined_call_operand.vmem [shape: s32[128,8], index: 0, kind: input, shape index: {}]
  %s1 = inlined_call_operand.vmem [shape: f32[1,128], index: 1, kind: input, shape index: {}]
  %s2 = inlined_call_operand.<no memory space> [shape: f32[1,1], index: 2, kind: input, shape index: {}]
  %s3 = inlined_call_operand.vmem [shape: f32[1,128], index: 3, kind: output, shape index: {}]
  %s4 = sld [smem:[#allocation0]]
  $region22: #{deepsets_forward.3} parent=0
    _
  %s6 = ssub.s32 1, %s4
  %s7 = scalar_select 0, %s6, %s4
  %v8 = vstv %s2
  %9 = vst [vmem:[#allocation2] sm:$0x1] %v8
  // Predicated region
  $region2: #{deepsets_forward.3} parent=0 // pred_check
    _
  $region3: #{deepsets_forward.3} parent=0 // pred_check_branch
    %11 = sbr.rel (0) target = $region5
  $region4: #{deepsets_forward.3} parent=0 // pred_region
    _
  $region5: #{deepsets_forward.3} parent=0 // pred_fallthru
    _
  // Predicated region
  $region6: #{deepsets_forward.3} parent=0 // pred_check
    _
  $region7: #{deepsets_forward.3} parent=0 // pred_check_branch
    %13 = sbr.rel (0) target = $region9
  $region8: #{deepsets_forward.3} parent=0 // pred_region
    _
  $region9: #{deepsets_forward.3} parent=0 // pred_fallthru
    _
  // Predicated region
  $region10: #{deepsets_forward.3} parent=0 // pred_check
    _
  $region11: #{deepsets_forward.3} parent=0 // pred_check_branch
    %15 = sbr.rel (0) target = $region13
  $region12: #{deepsets_forward.3} parent=0 // pred_region
    _
  $region13: #{deepsets_forward.3} parent=0 // pred_fallthru
    _
  %v16 = vld [vmem:[%s0] sm:$0xff]
  %v17 = vld [vmem:[%s0 + $0x8] sm:$0xff]
  %v18 = vld [vmem:[%s0 + $0x10] sm:$0xff]
  %v19 = vld [vmem:[%s0 + $0x18] sm:$0xff]
  %v20 = vld [vmem:[%s0 + $0x20] sm:$0xff]
  %v21 = vld [vmem:[%s0 + $0x28] sm:$0xff]
  %v22 = vld [vmem:[%s0 + $0x30] sm:$0xff]
  %v23 = vld [vmem:[%s0 + $0x38] sm:$0xff]
  %v24 = vld [vmem:[%s0 + $0x40] sm:$0xff]
  %v25 = vld [vmem:[%s0 + $0x48] sm:$0xff]
  %v26 = vld [vmem:[%s0 + $0x50] sm:$0xff]
  %v27 = vld [vmem:[%s0 + $0x58] sm:$0xff]
  %v28 = vld [vmem:[%s0 + $0x60] sm:$0xff]
  %v29 = vld [vmem:[%s0 + $0x68] sm:$0xff]
  %v30 = vld [vmem:[%s0 + $0x70] sm:$0xff]
  %v31 = vld [vmem:[%s0 + $0x78] sm:$0xff]
  %v32 = vlaneseq
  %v33 = vand.u32 %v32, 127
  %34 = vset.pattern.permute.xlu0 0
  %35 = vperm.xlu0 %34, %v16
  %v36 = vpop.permute.xlu0 %35
  %37 = vset.pattern.permute.xlu0 0
  %38 = vperm.xlu0 %37, %v17
  %v39 = vpop.permute.xlu0 %38
  %40 = vset.pattern.permute.xlu0 0
  %41 = vperm.xlu0 %40, %v18
  %v42 = vpop.permute.xlu0 %41
  %43 = vset.pattern.permute.xlu0 0
  %44 = vperm.xlu0 %43, %v19
  %v45 = vpop.permute.xlu0 %44
  %46 = vset.pattern.permute.xlu0 0
  %47 = vperm.xlu0 %46, %v20
  %v48 = vpop.permute.xlu0 %47
  %49 = vset.pattern.permute.xlu0 0
  %50 = vperm.xlu0 %49, %v21
  %v51 = vpop.permute.xlu0 %50
  %52 = vset.pattern.permute.xlu0 0
  %53 = vperm.xlu0 %52, %v22
  %v54 = vpop.permute.xlu0 %53
  %55 = vset.pattern.permute.xlu0 0
  %56 = vperm.xlu0 %55, %v23
  %v57 = vpop.permute.xlu0 %56
  %58 = vset.pattern.permute.xlu0 0
  %59 = vperm.xlu0 %58, %v24
  %v60 = vpop.permute.xlu0 %59
  %61 = vset.pattern.permute.xlu0 0
  %62 = vperm.xlu0 %61, %v25
  %v63 = vpop.permute.xlu0 %62
  %64 = vset.pattern.permute.xlu0 0
  %65 = vperm.xlu0 %64, %v26
  %v66 = vpop.permute.xlu0 %65
  %67 = vset.pattern.permute.xlu0 0
  %68 = vperm.xlu0 %67, %v27
  %v69 = vpop.permute.xlu0 %68
  %70 = vset.pattern.permute.xlu0 0
  %71 = vperm.xlu0 %70, %v28
  %v72 = vpop.permute.xlu0 %71
  %73 = vset.pattern.permute.xlu0 0
  %74 = vperm.xlu0 %73, %v29
  %v75 = vpop.permute.xlu0 %74
  %76 = vset.pattern.permute.xlu0 0
  %77 = vperm.xlu0 %76, %v30
  %v78 = vpop.permute.xlu0 %77
  %79 = vset.pattern.permute.xlu0 0
  %80 = vperm.xlu0 %79, %v31
  %v81 = vpop.permute.xlu0 %80
  %vm82 = vcmp.eq.s32.totalorder %v36, %v33
  %vm83 = vcmp.eq.s32.totalorder %v39, %v33
  %vm84 = vcmp.eq.s32.totalorder %v42, %v33
  %vm85 = vcmp.eq.s32.totalorder %v45, %v33
  %vm86 = vcmp.eq.s32.totalorder %v48, %v33
  %vm87 = vcmp.eq.s32.totalorder %v51, %v33
  %vm88 = vcmp.eq.s32.totalorder %v54, %v33
  %vm89 = vcmp.eq.s32.totalorder %v57, %v33
  %vm90 = vcmp.eq.s32.totalorder %v60, %v33
  %vm91 = vcmp.eq.s32.totalorder %v63, %v33
  %vm92 = vcmp.eq.s32.totalorder %v66, %v33
  %vm93 = vcmp.eq.s32.totalorder %v69, %v33
  %vm94 = vcmp.eq.s32.totalorder %v72, %v33
  %vm95 = vcmp.eq.s32.totalorder %v75, %v33
  %vm96 = vcmp.eq.s32.totalorder %v78, %v33
  %vm97 = vcmp.eq.s32.totalorder %v81, %v33
  %v98 = vsel %vm82, 1, 0
  %v99 = vsel %vm83, 1, 0
  %v100 = vsel %vm84, 1, 0
  %v101 = vsel %vm85, 1, 0
  %v102 = vsel %vm86, 1, 0
  %v103 = vsel %vm87, 1, 0
  %v104 = vsel %vm88, 1, 0
  %v105 = vsel %vm89, 1, 0
  %v106 = vsel %vm90, 1, 0
  %v107 = vsel %vm91, 1, 0
  %v108 = vsel %vm92, 1, 0
  %v109 = vsel %vm93, 1, 0
  %v110 = vsel %vm94, 1, 0
  %v111 = vsel %vm95, 1, 0
  %v112 = vsel %vm96, 1, 0
  %v113 = vsel %vm97, 1, 0
  %v114 = vcvt.s32.f32 %v98
  %v115 = vcvt.s32.f32 %v99
  %v116 = vcvt.s32.f32 %v100
  %v117 = vcvt.s32.f32 %v101
  %v118 = vcvt.s32.f32 %v102
  %v119 = vcvt.s32.f32 %v103
  %v120 = vcvt.s32.f32 %v104
  %v121 = vcvt.s32.f32 %v105
  %v122 = vcvt.s32.f32 %v106
  %v123 = vcvt.s32.f32 %v107
  %v124 = vcvt.s32.f32 %v108
  %v125 = vcvt.s32.f32 %v109
  %v126 = vcvt.s32.f32 %v110
  %v127 = vcvt.s32.f32 %v111
  %v128 = vcvt.s32.f32 %v112
  %v129 = vcvt.s32.f32 %v113
  %v130 = vadd.f32 %v114, 0.0
  %v131 = vadd.f32 %v115, 0.0
  %v132 = vadd.f32 %v116, 0.0
  %v133 = vadd.f32 %v117, 0.0
  %v134 = vadd.f32 %v118, 0.0
  %v135 = vadd.f32 %v119, 0.0
  %v136 = vadd.f32 %v120, 0.0
  %v137 = vadd.f32 %v121, 0.0
  %v138 = vadd.f32 %v122, 0.0
  %v139 = vadd.f32 %v123, 0.0
  %v140 = vadd.f32 %v124, 0.0
  %v141 = vadd.f32 %v125, 0.0
  %v142 = vadd.f32 %v126, 0.0
  %v143 = vadd.f32 %v127, 0.0
  %v144 = vadd.f32 %v128, 0.0
  %v145 = vadd.f32 %v129, 0.0
  %146 = vset.pattern.permute.xlu0 1
  %147 = vperm.xlu0 %146, %v16
  %v148 = vpop.permute.xlu0 %147
  %149 = vset.pattern.permute.xlu0 1
  %150 = vperm.xlu0 %149, %v17
  %v151 = vpop.permute.xlu0 %150
  %152 = vset.pattern.permute.xlu0 1
  %153 = vperm.xlu0 %152, %v18
  %v154 = vpop.permute.xlu0 %153
  %155 = vset.pattern.permute.xlu0 1
  %156 = vperm.xlu0 %155, %v19
  %v157 = vpop.permute.xlu0 %156
  %158 = vset.pattern.permute.xlu0 1
  %159 = vperm.xlu0 %158, %v20
  %v160 = vpop.permute.xlu0 %159
  %161 = vset.pattern.permute.xlu0 1
  %162 = vperm.xlu0 %161, %v21
  %v163 = vpop.permute.xlu0 %162
  %164 = vset.pattern.permute.xlu0 1
  %165 = vperm.xlu0 %164, %v22
  %v166 = vpop.permute.xlu0 %165
  %167 = vset.pattern.permute.xlu0 1
  %168 = vperm.xlu0 %167, %v23
  %v169 = vpop.permute.xlu0 %168
  %170 = vset.pattern.permute.xlu0 1
  %171 = vperm.xlu0 %170, %v24
  %v172 = vpop.permute.xlu0 %171
  %173 = vset.pattern.permute.xlu0 1
  %174 = vperm.xlu0 %173, %v25
  %v175 = vpop.permute.xlu0 %174
  %176 = vset.pattern.permute.xlu0 1
  %177 = vperm.xlu0 %176, %v26
  %v178 = vpop.permute.xlu0 %177
  %179 = vset.pattern.permute.xlu0 1
  %180 = vperm.xlu0 %179, %v27
  %v181 = vpop.permute.xlu0 %180
  %182 = vset.pattern.permute.xlu0 1
  %183 = vperm.xlu0 %182, %v28
  %v184 = vpop.permute.xlu0 %183
  %185 = vset.pattern.permute.xlu0 1
  %186 = vperm.xlu0 %185, %v29
  %v187 = vpop.permute.xlu0 %186
  %188 = vset.pattern.permute.xlu0 1
  %189 = vperm.xlu0 %188, %v30
  %v190 = vpop.permute.xlu0 %189
  %191 = vset.pattern.permute.xlu0 1
  %192 = vperm.xlu0 %191, %v31
  %v193 = vpop.permute.xlu0 %192
  %vm194 = vcmp.eq.s32.totalorder %v148, %v33
  %vm195 = vcmp.eq.s32.totalorder %v151, %v33
  %vm196 = vcmp.eq.s32.totalorder %v154, %v33
  %vm197 = vcmp.eq.s32.totalorder %v157, %v33
  %vm198 = vcmp.eq.s32.totalorder %v160, %v33
  %vm199 = vcmp.eq.s32.totalorder %v163, %v33
  %vm200 = vcmp.eq.s32.totalorder %v166, %v33
  %vm201 = vcmp.eq.s32.totalorder %v169, %v33
  %vm202 = vcmp.eq.s32.totalorder %v172, %v33
  %vm203 = vcmp.eq.s32.totalorder %v175, %v33
  %vm204 = vcmp.eq.s32.totalorder %v178, %v33
  %vm205 = vcmp.eq.s32.totalorder %v181, %v33
  %vm206 = vcmp.eq.s32.totalorder %v184, %v33
  %vm207 = vcmp.eq.s32.totalorder %v187, %v33
  %vm208 = vcmp.eq.s32.totalorder %v190, %v33
  %vm209 = vcmp.eq.s32.totalorder %v193, %v33
  %v210 = vsel %vm194, 1, 0
  %v211 = vsel %vm195, 1, 0
  %v212 = vsel %vm196, 1, 0
  %v213 = vsel %vm197, 1, 0
  %v214 = vsel %vm198, 1, 0
  %v215 = vsel %vm199, 1, 0
  %v216 = vsel %vm200, 1, 0
  %v217 = vsel %vm201, 1, 0
  %v218 = vsel %vm202, 1, 0
  %v219 = vsel %vm203, 1, 0
  %v220 = vsel %vm204, 1, 0
  %v221 = vsel %vm205, 1, 0
  %v222 = vsel %vm206, 1, 0
  %v223 = vsel %vm207, 1, 0
  %v224 = vsel %vm208, 1, 0
  %v225 = vsel %vm209, 1, 0
  %v226 = vcvt.s32.f32 %v210
  %v227 = vcvt.s32.f32 %v211
  %v228 = vcvt.s32.f32 %v212
  %v229 = vcvt.s32.f32 %v213
  %v230 = vcvt.s32.f32 %v214
  %v231 = vcvt.s32.f32 %v215
  %v232 = vcvt.s32.f32 %v216
  %v233 = vcvt.s32.f32 %v217
  %v234 = vcvt.s32.f32 %v218
  %v235 = vcvt.s32.f32 %v219
  %v236 = vcvt.s32.f32 %v220
  %v237 = vcvt.s32.f32 %v221
  %v238 = vcvt.s32.f32 %v222
  %v239 = vcvt.s32.f32 %v223
  %v240 = vcvt.s32.f32 %v224
  %v241 = vcvt.s32.f32 %v225
  %v242 = vadd.f32 %v130, %v226
  %v243 = vadd.f32 %v131, %v227
  %v244 = vadd.f32 %v132, %v228
  %v245 = vadd.f32 %v133, %v229
  %v246 = vadd.f32 %v134, %v230
  %v247 = vadd.f32 %v135, %v231
  %v248 = vadd.f32 %v136, %v232
  %v249 = vadd.f32 %v137, %v233
  %v250 = vadd.f32 %v138, %v234
  %v251 = vadd.f32 %v139, %v235
  %v252 = vadd.f32 %v140, %v236
  %v253 = vadd.f32 %v141, %v237
  %v254 = vadd.f32 %v142, %v238
  %v255 = vadd.f32 %v143, %v239
  %v256 = vadd.f32 %v144, %v240
  %v257 = vadd.f32 %v145, %v241
  %258 = vset.pattern.permute.xlu0 2
  %259 = vperm.xlu0 %258, %v16
  %v260 = vpop.permute.xlu0 %259
  %261 = vset.pattern.permute.xlu0 2
  %262 = vperm.xlu0 %261, %v17
  %v263 = vpop.permute.xlu0 %262
  %264 = vset.pattern.permute.xlu0 2
  %265 = vperm.xlu0 %264, %v18
  %v266 = vpop.permute.xlu0 %265
  %267 = vset.pattern.permute.xlu0 2
  %268 = vperm.xlu0 %267, %v19
  %v269 = vpop.permute.xlu0 %268
  %270 = vset.pattern.permute.xlu0 2
  %271 = vperm.xlu0 %270, %v20
  %v272 = vpop.permute.xlu0 %271
  %273 = vset.pattern.permute.xlu0 2
  %274 = vperm.xlu0 %273, %v21
  %v275 = vpop.permute.xlu0 %274
  %276 = vset.pattern.permute.xlu0 2
  %277 = vperm.xlu0 %276, %v22
  %v278 = vpop.permute.xlu0 %277
  %279 = vset.pattern.permute.xlu0 2
  %280 = vperm.xlu0 %279, %v23
  %v281 = vpop.permute.xlu0 %280
  %282 = vset.pattern.permute.xlu0 2
  %283 = vperm.xlu0 %282, %v24
  %v284 = vpop.permute.xlu0 %283
  %285 = vset.pattern.permute.xlu0 2
  %286 = vperm.xlu0 %285, %v25
  %v287 = vpop.permute.xlu0 %286
  %288 = vset.pattern.permute.xlu0 2
  %289 = vperm.xlu0 %288, %v26
  %v290 = vpop.permute.xlu0 %289
  %291 = vset.pattern.permute.xlu0 2
  %292 = vperm.xlu0 %291, %v27
  %v293 = vpop.permute.xlu0 %292
  %294 = vset.pattern.permute.xlu0 2
  %295 = vperm.xlu0 %294, %v28
  %v296 = vpop.permute.xlu0 %295
  %297 = vset.pattern.permute.xlu0 2
  %298 = vperm.xlu0 %297, %v29
  %v299 = vpop.permute.xlu0 %298
  %300 = vset.pattern.permute.xlu0 2
  %301 = vperm.xlu0 %300, %v30
  %v302 = vpop.permute.xlu0 %301
  %303 = vset.pattern.permute.xlu0 2
  %304 = vperm.xlu0 %303, %v31
  %v305 = vpop.permute.xlu0 %304
  %vm306 = vcmp.eq.s32.totalorder %v260, %v33
  %vm307 = vcmp.eq.s32.totalorder %v263, %v33
  %vm308 = vcmp.eq.s32.totalorder %v266, %v33
  %vm309 = vcmp.eq.s32.totalorder %v269, %v33
  %vm310 = vcmp.eq.s32.totalorder %v272, %v33
  %vm311 = vcmp.eq.s32.totalorder %v275, %v33
  %vm312 = vcmp.eq.s32.totalorder %v278, %v33
  %vm313 = vcmp.eq.s32.totalorder %v281, %v33
  %vm314 = vcmp.eq.s32.totalorder %v284, %v33
  %vm315 = vcmp.eq.s32.totalorder %v287, %v33
  %vm316 = vcmp.eq.s32.totalorder %v290, %v33
  %vm317 = vcmp.eq.s32.totalorder %v293, %v33
  %vm318 = vcmp.eq.s32.totalorder %v296, %v33
  %vm319 = vcmp.eq.s32.totalorder %v299, %v33
  %vm320 = vcmp.eq.s32.totalorder %v302, %v33
  %vm321 = vcmp.eq.s32.totalorder %v305, %v33
  %v322 = vsel %vm306, 1, 0
  %v323 = vsel %vm307, 1, 0
  %v324 = vsel %vm308, 1, 0
  %v325 = vsel %vm309, 1, 0
  %v326 = vsel %vm310, 1, 0
  %v327 = vsel %vm311, 1, 0
  %v328 = vsel %vm312, 1, 0
  %v329 = vsel %vm313, 1, 0
  %v330 = vsel %vm314, 1, 0
  %v331 = vsel %vm315, 1, 0
  %v332 = vsel %vm316, 1, 0
  %v333 = vsel %vm317, 1, 0
  %v334 = vsel %vm318, 1, 0
  %v335 = vsel %vm319, 1, 0
  %v336 = vsel %vm320, 1, 0
  %v337 = vsel %vm321, 1, 0
  %v338 = vcvt.s32.f32 %v322
  %v339 = vcvt.s32.f32 %v323
  %v340 = vcvt.s32.f32 %v324
  %v341 = vcvt.s32.f32 %v325
  %v342 = vcvt.s32.f32 %v326
  %v343 = vcvt.s32.f32 %v327
  %v344 = vcvt.s32.f32 %v328
  %v345 = vcvt.s32.f32 %v329
  %v346 = vcvt.s32.f32 %v330
  %v347 = vcvt.s32.f32 %v331
  %v348 = vcvt.s32.f32 %v332
  %v349 = vcvt.s32.f32 %v333
  %v350 = vcvt.s32.f32 %v334
  %v351 = vcvt.s32.f32 %v335
  %v352 = vcvt.s32.f32 %v336
  %v353 = vcvt.s32.f32 %v337
  %v354 = vadd.f32 %v242, %v338
  %v355 = vadd.f32 %v243, %v339
  %v356 = vadd.f32 %v244, %v340
  %v357 = vadd.f32 %v245, %v341
  %v358 = vadd.f32 %v246, %v342
  %v359 = vadd.f32 %v247, %v343
  %v360 = vadd.f32 %v248, %v344
  %v361 = vadd.f32 %v249, %v345
  %v362 = vadd.f32 %v250, %v346
  %v363 = vadd.f32 %v251, %v347
  %v364 = vadd.f32 %v252, %v348
  %v365 = vadd.f32 %v253, %v349
  %v366 = vadd.f32 %v254, %v350
  %v367 = vadd.f32 %v255, %v351
  %v368 = vadd.f32 %v256, %v352
  %v369 = vadd.f32 %v257, %v353
  %370 = vset.pattern.permute.xlu0 3
  %371 = vperm.xlu0 %370, %v16
  %v372 = vpop.permute.xlu0 %371
  %373 = vset.pattern.permute.xlu0 3
  %374 = vperm.xlu0 %373, %v17
  %v375 = vpop.permute.xlu0 %374
  %376 = vset.pattern.permute.xlu0 3
  %377 = vperm.xlu0 %376, %v18
  %v378 = vpop.permute.xlu0 %377
  %379 = vset.pattern.permute.xlu0 3
  %380 = vperm.xlu0 %379, %v19
  %v381 = vpop.permute.xlu0 %380
  %382 = vset.pattern.permute.xlu0 3
  %383 = vperm.xlu0 %382, %v20
  %v384 = vpop.permute.xlu0 %383
  %385 = vset.pattern.permute.xlu0 3
  %386 = vperm.xlu0 %385, %v21
  %v387 = vpop.permute.xlu0 %386
  %388 = vset.pattern.permute.xlu0 3
  %389 = vperm.xlu0 %388, %v22
  %v390 = vpop.permute.xlu0 %389
  %391 = vset.pattern.permute.xlu0 3
  %392 = vperm.xlu0 %391, %v23
  %v393 = vpop.permute.xlu0 %392
  %394 = vset.pattern.permute.xlu0 3
  %395 = vperm.xlu0 %394, %v24
  %v396 = vpop.permute.xlu0 %395
  %397 = vset.pattern.permute.xlu0 3
  %398 = vperm.xlu0 %397, %v25
  %v399 = vpop.permute.xlu0 %398
  %400 = vset.pattern.permute.xlu0 3
  %401 = vperm.xlu0 %400, %v26
  %v402 = vpop.permute.xlu0 %401
  %403 = vset.pattern.permute.xlu0 3
  %404 = vperm.xlu0 %403, %v27
  %v405 = vpop.permute.xlu0 %404
  %406 = vset.pattern.permute.xlu0 3
  %407 = vperm.xlu0 %406, %v28
  %v408 = vpop.permute.xlu0 %407
  %409 = vset.pattern.permute.xlu0 3
  %410 = vperm.xlu0 %409, %v29
  %v411 = vpop.permute.xlu0 %410
  %412 = vset.pattern.permute.xlu0 3
  %413 = vperm.xlu0 %412, %v30
  %v414 = vpop.permute.xlu0 %413
  %415 = vset.pattern.permute.xlu0 3
  %416 = vperm.xlu0 %415, %v31
  %v417 = vpop.permute.xlu0 %416
  %vm418 = vcmp.eq.s32.totalorder %v372, %v33
  %vm419 = vcmp.eq.s32.totalorder %v375, %v33
  %vm420 = vcmp.eq.s32.totalorder %v378, %v33
  %vm421 = vcmp.eq.s32.totalorder %v381, %v33
  %vm422 = vcmp.eq.s32.totalorder %v384, %v33
  %vm423 = vcmp.eq.s32.totalorder %v387, %v33
  %vm424 = vcmp.eq.s32.totalorder %v390, %v33
  %vm425 = vcmp.eq.s32.totalorder %v393, %v33
  %vm426 = vcmp.eq.s32.totalorder %v396, %v33
  %vm427 = vcmp.eq.s32.totalorder %v399, %v33
  %vm428 = vcmp.eq.s32.totalorder %v402, %v33
  %vm429 = vcmp.eq.s32.totalorder %v405, %v33
  %vm430 = vcmp.eq.s32.totalorder %v408, %v33
  %vm431 = vcmp.eq.s32.totalorder %v411, %v33
  %vm432 = vcmp.eq.s32.totalorder %v414, %v33
  %vm433 = vcmp.eq.s32.totalorder %v417, %v33
  %v434 = vsel %vm418, 1, 0
  %v435 = vsel %vm419, 1, 0
  %v436 = vsel %vm420, 1, 0
  %v437 = vsel %vm421, 1, 0
  %v438 = vsel %vm422, 1, 0
  %v439 = vsel %vm423, 1, 0
  %v440 = vsel %vm424, 1, 0
  %v441 = vsel %vm425, 1, 0
  %v442 = vsel %vm426, 1, 0
  %v443 = vsel %vm427, 1, 0
  %v444 = vsel %vm428, 1, 0
  %v445 = vsel %vm429, 1, 0
  %v446 = vsel %vm430, 1, 0
  %v447 = vsel %vm431, 1, 0
  %v448 = vsel %vm432, 1, 0
  %v449 = vsel %vm433, 1, 0
  %v450 = vcvt.s32.f32 %v434
  %v451 = vcvt.s32.f32 %v435
  %v452 = vcvt.s32.f32 %v436
  %v453 = vcvt.s32.f32 %v437
  %v454 = vcvt.s32.f32 %v438
  %v455 = vcvt.s32.f32 %v439
  %v456 = vcvt.s32.f32 %v440
  %v457 = vcvt.s32.f32 %v441
  %v458 = vcvt.s32.f32 %v442
  %v459 = vcvt.s32.f32 %v443
  %v460 = vcvt.s32.f32 %v444
  %v461 = vcvt.s32.f32 %v445
  %v462 = vcvt.s32.f32 %v446
  %v463 = vcvt.s32.f32 %v447
  %v464 = vcvt.s32.f32 %v448
  %v465 = vcvt.s32.f32 %v449
  %v466 = vadd.f32 %v354, %v450
  %v467 = vadd.f32 %v355, %v451
  %v468 = vadd.f32 %v356, %v452
  %v469 = vadd.f32 %v357, %v453
  %v470 = vadd.f32 %v358, %v454
  %v471 = vadd.f32 %v359, %v455
  %v472 = vadd.f32 %v360, %v456
  %v473 = vadd.f32 %v361, %v457
  %v474 = vadd.f32 %v362, %v458
  %v475 = vadd.f32 %v363, %v459
  %v476 = vadd.f32 %v364, %v460
  %v477 = vadd.f32 %v365, %v461
  %v478 = vadd.f32 %v366, %v462
  %v479 = vadd.f32 %v367, %v463
  %v480 = vadd.f32 %v368, %v464
  %v481 = vadd.f32 %v369, %v465
  %482 = vset.pattern.permute.xlu0 4
  %483 = vperm.xlu0 %482, %v16
  %v484 = vpop.permute.xlu0 %483
  %485 = vset.pattern.permute.xlu0 4
  %486 = vperm.xlu0 %485, %v17
  %v487 = vpop.permute.xlu0 %486
  %488 = vset.pattern.permute.xlu0 4
  %489 = vperm.xlu0 %488, %v18
  %v490 = vpop.permute.xlu0 %489
  %491 = vset.pattern.permute.xlu0 4
  %492 = vperm.xlu0 %491, %v19
  %v493 = vpop.permute.xlu0 %492
  %494 = vset.pattern.permute.xlu0 4
  %495 = vperm.xlu0 %494, %v20
  %v496 = vpop.permute.xlu0 %495
  %497 = vset.pattern.permute.xlu0 4
  %498 = vperm.xlu0 %497, %v21
  %v499 = vpop.permute.xlu0 %498
  %500 = vset.pattern.permute.xlu0 4
  %501 = vperm.xlu0 %500, %v22
  %v502 = vpop.permute.xlu0 %501
  %503 = vset.pattern.permute.xlu0 4
  %504 = vperm.xlu0 %503, %v23
  %v505 = vpop.permute.xlu0 %504
  %506 = vset.pattern.permute.xlu0 4
  %507 = vperm.xlu0 %506, %v24
  %v508 = vpop.permute.xlu0 %507
  %509 = vset.pattern.permute.xlu0 4
  %510 = vperm.xlu0 %509, %v25
  %v511 = vpop.permute.xlu0 %510
  %512 = vset.pattern.permute.xlu0 4
  %513 = vperm.xlu0 %512, %v26
  %v514 = vpop.permute.xlu0 %513
  %515 = vset.pattern.permute.xlu0 4
  %516 = vperm.xlu0 %515, %v27
  %v517 = vpop.permute.xlu0 %516
  %518 = vset.pattern.permute.xlu0 4
  %519 = vperm.xlu0 %518, %v28
  %v520 = vpop.permute.xlu0 %519
  %521 = vset.pattern.permute.xlu0 4
  %522 = vperm.xlu0 %521, %v29
  %v523 = vpop.permute.xlu0 %522
  %524 = vset.pattern.permute.xlu0 4
  %525 = vperm.xlu0 %524, %v30
  %v526 = vpop.permute.xlu0 %525
  %527 = vset.pattern.permute.xlu0 4
  %528 = vperm.xlu0 %527, %v31
  %v529 = vpop.permute.xlu0 %528
  %vm530 = vcmp.eq.s32.totalorder %v484, %v33
  %vm531 = vcmp.eq.s32.totalorder %v487, %v33
  %vm532 = vcmp.eq.s32.totalorder %v490, %v33
  %vm533 = vcmp.eq.s32.totalorder %v493, %v33
  %vm534 = vcmp.eq.s32.totalorder %v496, %v33
  %vm535 = vcmp.eq.s32.totalorder %v499, %v33
  %vm536 = vcmp.eq.s32.totalorder %v502, %v33
  %vm537 = vcmp.eq.s32.totalorder %v505, %v33
  %vm538 = vcmp.eq.s32.totalorder %v508, %v33
  %vm539 = vcmp.eq.s32.totalorder %v511, %v33
  %vm540 = vcmp.eq.s32.totalorder %v514, %v33
  %vm541 = vcmp.eq.s32.totalorder %v517, %v33
  %vm542 = vcmp.eq.s32.totalorder %v520, %v33
  %vm543 = vcmp.eq.s32.totalorder %v523, %v33
  %vm544 = vcmp.eq.s32.totalorder %v526, %v33
  %vm545 = vcmp.eq.s32.totalorder %v529, %v33
  %v546 = vsel %vm530, 1, 0
  %v547 = vsel %vm531, 1, 0
  %v548 = vsel %vm532, 1, 0
  %v549 = vsel %vm533, 1, 0
  %v550 = vsel %vm534, 1, 0
  %v551 = vsel %vm535, 1, 0
  %v552 = vsel %vm536, 1, 0
  %v553 = vsel %vm537, 1, 0
  %v554 = vsel %vm538, 1, 0
  %v555 = vsel %vm539, 1, 0
  %v556 = vsel %vm540, 1, 0
  %v557 = vsel %vm541, 1, 0
  %v558 = vsel %vm542, 1, 0
  %v559 = vsel %vm543, 1, 0
  %v560 = vsel %vm544, 1, 0
  %v561 = vsel %vm545, 1, 0
  %v562 = vcvt.s32.f32 %v546
  %v563 = vcvt.s32.f32 %v547
  %v564 = vcvt.s32.f32 %v548
  %v565 = vcvt.s32.f32 %v549
  %v566 = vcvt.s32.f32 %v550
  %v567 = vcvt.s32.f32 %v551
  %v568 = vcvt.s32.f32 %v552
  %v569 = vcvt.s32.f32 %v553
  %v570 = vcvt.s32.f32 %v554
  %v571 = vcvt.s32.f32 %v555
  %v572 = vcvt.s32.f32 %v556
  %v573 = vcvt.s32.f32 %v557
  %v574 = vcvt.s32.f32 %v558
  %v575 = vcvt.s32.f32 %v559
  %v576 = vcvt.s32.f32 %v560
  %v577 = vcvt.s32.f32 %v561
  %v578 = vadd.f32 %v466, %v562
  %v579 = vadd.f32 %v467, %v563
  %v580 = vadd.f32 %v468, %v564
  %v581 = vadd.f32 %v469, %v565
  %v582 = vadd.f32 %v470, %v566
  %v583 = vadd.f32 %v471, %v567
  %v584 = vadd.f32 %v472, %v568
  %v585 = vadd.f32 %v473, %v569
  %v586 = vadd.f32 %v474, %v570
  %v587 = vadd.f32 %v475, %v571
  %v588 = vadd.f32 %v476, %v572
  %v589 = vadd.f32 %v477, %v573
  %v590 = vadd.f32 %v478, %v574
  %v591 = vadd.f32 %v479, %v575
  %v592 = vadd.f32 %v480, %v576
  %v593 = vadd.f32 %v481, %v577
  %594 = vset.pattern.permute.xlu0 5
  %595 = vperm.xlu0 %594, %v16
  %v596 = vpop.permute.xlu0 %595
  %597 = vset.pattern.permute.xlu0 5
  %598 = vperm.xlu0 %597, %v17
  %v599 = vpop.permute.xlu0 %598
  %600 = vset.pattern.permute.xlu0 5
  %601 = vperm.xlu0 %600, %v18
  %v602 = vpop.permute.xlu0 %601
  %603 = vset.pattern.permute.xlu0 5
  %604 = vperm.xlu0 %603, %v19
  %v605 = vpop.permute.xlu0 %604
  %606 = vset.pattern.permute.xlu0 5
  %607 = vperm.xlu0 %606, %v20
  %v608 = vpop.permute.xlu0 %607
  %609 = vset.pattern.permute.xlu0 5
  %610 = vperm.xlu0 %609, %v21
  %v611 = vpop.permute.xlu0 %610
  %612 = vset.pattern.permute.xlu0 5
  %613 = vperm.xlu0 %612, %v22
  %v614 = vpop.permute.xlu0 %613
  %615 = vset.pattern.permute.xlu0 5
  %616 = vperm.xlu0 %615, %v23
  %v617 = vpop.permute.xlu0 %616
  %618 = vset.pattern.permute.xlu0 5
  %619 = vperm.xlu0 %618, %v24
  %v620 = vpop.permute.xlu0 %619
  %621 = vset.pattern.permute.xlu0 5
  %622 = vperm.xlu0 %621, %v25
  %v623 = vpop.permute.xlu0 %622
  %624 = vset.pattern.permute.xlu0 5
  %625 = vperm.xlu0 %624, %v26
  %v626 = vpop.permute.xlu0 %625
  %627 = vset.pattern.permute.xlu0 5
  %628 = vperm.xlu0 %627, %v27
  %v629 = vpop.permute.xlu0 %628
  %630 = vset.pattern.permute.xlu0 5
  %631 = vperm.xlu0 %630, %v28
  %v632 = vpop.permute.xlu0 %631
  %633 = vset.pattern.permute.xlu0 5
  %634 = vperm.xlu0 %633, %v29
  %v635 = vpop.permute.xlu0 %634
  %636 = vset.pattern.permute.xlu0 5
  %637 = vperm.xlu0 %636, %v30
  %v638 = vpop.permute.xlu0 %637
  %639 = vset.pattern.permute.xlu0 5
  %640 = vperm.xlu0 %639, %v31
  %v641 = vpop.permute.xlu0 %640
  %vm642 = vcmp.eq.s32.totalorder %v596, %v33
  %vm643 = vcmp.eq.s32.totalorder %v599, %v33
  %vm644 = vcmp.eq.s32.totalorder %v602, %v33
  %vm645 = vcmp.eq.s32.totalorder %v605, %v33
  %vm646 = vcmp.eq.s32.totalorder %v608, %v33
  %vm647 = vcmp.eq.s32.totalorder %v611, %v33
  %vm648 = vcmp.eq.s32.totalorder %v614, %v33
  %vm649 = vcmp.eq.s32.totalorder %v617, %v33
  %vm650 = vcmp.eq.s32.totalorder %v620, %v33
  %vm651 = vcmp.eq.s32.totalorder %v623, %v33
  %vm652 = vcmp.eq.s32.totalorder %v626, %v33
  %vm653 = vcmp.eq.s32.totalorder %v629, %v33
  %vm654 = vcmp.eq.s32.totalorder %v632, %v33
  %vm655 = vcmp.eq.s32.totalorder %v635, %v33
  %vm656 = vcmp.eq.s32.totalorder %v638, %v33
  %vm657 = vcmp.eq.s32.totalorder %v641, %v33
  %v658 = vsel %vm642, 1, 0
  %v659 = vsel %vm643, 1, 0
  %v660 = vsel %vm644, 1, 0
  %v661 = vsel %vm645, 1, 0
  %v662 = vsel %vm646, 1, 0
  %v663 = vsel %vm647, 1, 0
  %v664 = vsel %vm648, 1, 0
  %v665 = vsel %vm649, 1, 0
  %v666 = vsel %vm650, 1, 0
  %v667 = vsel %vm651, 1, 0
  %v668 = vsel %vm652, 1, 0
  %v669 = vsel %vm653, 1, 0
  %v670 = vsel %vm654, 1, 0
  %v671 = vsel %vm655, 1, 0
  %v672 = vsel %vm656, 1, 0
  %v673 = vsel %vm657, 1, 0
  %v674 = vcvt.s32.f32 %v658
  %v675 = vcvt.s32.f32 %v659
  %v676 = vcvt.s32.f32 %v660
  %v677 = vcvt.s32.f32 %v661
  %v678 = vcvt.s32.f32 %v662
  %v679 = vcvt.s32.f32 %v663
  %v680 = vcvt.s32.f32 %v664
  %v681 = vcvt.s32.f32 %v665
  %v682 = vcvt.s32.f32 %v666
  %v683 = vcvt.s32.f32 %v667
  %v684 = vcvt.s32.f32 %v668
  %v685 = vcvt.s32.f32 %v669
  %v686 = vcvt.s32.f32 %v670
  %v687 = vcvt.s32.f32 %v671
  %v688 = vcvt.s32.f32 %v672
  %v689 = vcvt.s32.f32 %v673
  %v690 = vadd.f32 %v578, %v674
  %v691 = vadd.f32 %v579, %v675
  %v692 = vadd.f32 %v580, %v676
  %v693 = vadd.f32 %v581, %v677
  %v694 = vadd.f32 %v582, %v678
  %v695 = vadd.f32 %v583, %v679
  %v696 = vadd.f32 %v584, %v680
  %v697 = vadd.f32 %v585, %v681
  %v698 = vadd.f32 %v586, %v682
  %v699 = vadd.f32 %v587, %v683
  %v700 = vadd.f32 %v588, %v684
  %v701 = vadd.f32 %v589, %v685
  %v702 = vadd.f32 %v590, %v686
  %v703 = vadd.f32 %v591, %v687
  %v704 = vadd.f32 %v592, %v688
  %v705 = vadd.f32 %v593, %v689
  %706 = vset.pattern.permute.xlu0 6
  %707 = vperm.xlu0 %706, %v16
  %v708 = vpop.permute.xlu0 %707
  %709 = vset.pattern.permute.xlu0 6
  %710 = vperm.xlu0 %709, %v17
  %v711 = vpop.permute.xlu0 %710
  %712 = vset.pattern.permute.xlu0 6
  %713 = vperm.xlu0 %712, %v18
  %v714 = vpop.permute.xlu0 %713
  %715 = vset.pattern.permute.xlu0 6
  %716 = vperm.xlu0 %715, %v19
  %v717 = vpop.permute.xlu0 %716
  %718 = vset.pattern.permute.xlu0 6
  %719 = vperm.xlu0 %718, %v20
  %v720 = vpop.permute.xlu0 %719
  %721 = vset.pattern.permute.xlu0 6
  %722 = vperm.xlu0 %721, %v21
  %v723 = vpop.permute.xlu0 %722
  %724 = vset.pattern.permute.xlu0 6
  %725 = vperm.xlu0 %724, %v22
  %v726 = vpop.permute.xlu0 %725
  %727 = vset.pattern.permute.xlu0 6
  %728 = vperm.xlu0 %727, %v23
  %v729 = vpop.permute.xlu0 %728
  %730 = vset.pattern.permute.xlu0 6
  %731 = vperm.xlu0 %730, %v24
  %v732 = vpop.permute.xlu0 %731
  %733 = vset.pattern.permute.xlu0 6
  %734 = vperm.xlu0 %733, %v25
  %v735 = vpop.permute.xlu0 %734
  %736 = vset.pattern.permute.xlu0 6
  %737 = vperm.xlu0 %736, %v26
  %v738 = vpop.permute.xlu0 %737
  %739 = vset.pattern.permute.xlu0 6
  %740 = vperm.xlu0 %739, %v27
  %v741 = vpop.permute.xlu0 %740
  %742 = vset.pattern.permute.xlu0 6
  %743 = vperm.xlu0 %742, %v28
  %v744 = vpop.permute.xlu0 %743
  %745 = vset.pattern.permute.xlu0 6
  %746 = vperm.xlu0 %745, %v29
  %v747 = vpop.permute.xlu0 %746
  %748 = vset.pattern.permute.xlu0 6
  %749 = vperm.xlu0 %748, %v30
  %v750 = vpop.permute.xlu0 %749
  %751 = vset.pattern.permute.xlu0 6
  %752 = vperm.xlu0 %751, %v31
  %v753 = vpop.permute.xlu0 %752
  %vm754 = vcmp.eq.s32.totalorder %v708, %v33
  %vm755 = vcmp.eq.s32.totalorder %v711, %v33
  %vm756 = vcmp.eq.s32.totalorder %v714, %v33
  %vm757 = vcmp.eq.s32.totalorder %v717, %v33
  %vm758 = vcmp.eq.s32.totalorder %v720, %v33
  %vm759 = vcmp.eq.s32.totalorder %v723, %v33
  %vm760 = vcmp.eq.s32.totalorder %v726, %v33
  %vm761 = vcmp.eq.s32.totalorder %v729, %v33
  %vm762 = vcmp.eq.s32.totalorder %v732, %v33
  %vm763 = vcmp.eq.s32.totalorder %v735, %v33
  %vm764 = vcmp.eq.s32.totalorder %v738, %v33
  %vm765 = vcmp.eq.s32.totalorder %v741, %v33
  %vm766 = vcmp.eq.s32.totalorder %v744, %v33
  %vm767 = vcmp.eq.s32.totalorder %v747, %v33
  %vm768 = vcmp.eq.s32.totalorder %v750, %v33
  %vm769 = vcmp.eq.s32.totalorder %v753, %v33
  %v770 = vsel %vm754, 1, 0
  %v771 = vsel %vm755, 1, 0
  %v772 = vsel %vm756, 1, 0
  %v773 = vsel %vm757, 1, 0
  %v774 = vsel %vm758, 1, 0
  %v775 = vsel %vm759, 1, 0
  %v776 = vsel %vm760, 1, 0
  %v777 = vsel %vm761, 1, 0
  %v778 = vsel %vm762, 1, 0
  %v779 = vsel %vm763, 1, 0
  %v780 = vsel %vm764, 1, 0
  %v781 = vsel %vm765, 1, 0
  %v782 = vsel %vm766, 1, 0
  %v783 = vsel %vm767, 1, 0
  %v784 = vsel %vm768, 1, 0
  %v785 = vsel %vm769, 1, 0
  %v786 = vcvt.s32.f32 %v770
  %v787 = vcvt.s32.f32 %v771
  %v788 = vcvt.s32.f32 %v772
  %v789 = vcvt.s32.f32 %v773
  %v790 = vcvt.s32.f32 %v774
  %v791 = vcvt.s32.f32 %v775
  %v792 = vcvt.s32.f32 %v776
  %v793 = vcvt.s32.f32 %v777
  %v794 = vcvt.s32.f32 %v778
  %v795 = vcvt.s32.f32 %v779
  %v796 = vcvt.s32.f32 %v780
  %v797 = vcvt.s32.f32 %v781
  %v798 = vcvt.s32.f32 %v782
  %v799 = vcvt.s32.f32 %v783
  %v800 = vcvt.s32.f32 %v784
  %v801 = vcvt.s32.f32 %v785
  %v802 = vadd.f32 %v690, %v786
  %v803 = vadd.f32 %v691, %v787
  %v804 = vadd.f32 %v692, %v788
  %v805 = vadd.f32 %v693, %v789
  %v806 = vadd.f32 %v694, %v790
  %v807 = vadd.f32 %v695, %v791
  %v808 = vadd.f32 %v696, %v792
  %v809 = vadd.f32 %v697, %v793
  %v810 = vadd.f32 %v698, %v794
  %v811 = vadd.f32 %v699, %v795
  %v812 = vadd.f32 %v700, %v796
  %v813 = vadd.f32 %v701, %v797
  %v814 = vadd.f32 %v702, %v798
  %v815 = vadd.f32 %v703, %v799
  %v816 = vadd.f32 %v704, %v800
  %v817 = vadd.f32 %v705, %v801
  %818 = vset.pattern.permute.xlu0 7
  %819 = vperm.xlu0 %818, %v16
  %v820 = vpop.permute.xlu0 %819
  %821 = vset.pattern.permute.xlu0 7
  %822 = vperm.xlu0 %821, %v17
  %v823 = vpop.permute.xlu0 %822
  %824 = vset.pattern.permute.xlu0 7
  %825 = vperm.xlu0 %824, %v18
  %v826 = vpop.permute.xlu0 %825
  %827 = vset.pattern.permute.xlu0 7
  %828 = vperm.xlu0 %827, %v19
  %v829 = vpop.permute.xlu0 %828
  %830 = vset.pattern.permute.xlu0 7
  %831 = vperm.xlu0 %830, %v20
  %v832 = vpop.permute.xlu0 %831
  %833 = vset.pattern.permute.xlu0 7
  %834 = vperm.xlu0 %833, %v21
  %v835 = vpop.permute.xlu0 %834
  %836 = vset.pattern.permute.xlu0 7
  %837 = vperm.xlu0 %836, %v22
  %v838 = vpop.permute.xlu0 %837
  %839 = vset.pattern.permute.xlu0 7
  %840 = vperm.xlu0 %839, %v23
  %v841 = vpop.permute.xlu0 %840
  %842 = vset.pattern.permute.xlu0 7
  %843 = vperm.xlu0 %842, %v24
  %v844 = vpop.permute.xlu0 %843
  %845 = vset.pattern.permute.xlu0 7
  %846 = vperm.xlu0 %845, %v25
  %v847 = vpop.permute.xlu0 %846
  %848 = vset.pattern.permute.xlu0 7
  %849 = vperm.xlu0 %848, %v26
  %v850 = vpop.permute.xlu0 %849
  %851 = vset.pattern.permute.xlu0 7
  %852 = vperm.xlu0 %851, %v27
  %v853 = vpop.permute.xlu0 %852
  %854 = vset.pattern.permute.xlu0 7
  %855 = vperm.xlu0 %854, %v28
  %v856 = vpop.permute.xlu0 %855
  %857 = vset.pattern.permute.xlu0 7
  %858 = vperm.xlu0 %857, %v29
  %v859 = vpop.permute.xlu0 %858
  %860 = vset.pattern.permute.xlu0 7
  %861 = vperm.xlu0 %860, %v30
  %v862 = vpop.permute.xlu0 %861
  %863 = vset.pattern.permute.xlu0 7
  %864 = vperm.xlu0 %863, %v31
  %v865 = vpop.permute.xlu0 %864
  %vm866 = vcmp.eq.s32.totalorder %v820, %v33
  %vm867 = vcmp.eq.s32.totalorder %v823, %v33
  %vm868 = vcmp.eq.s32.totalorder %v826, %v33
  %vm869 = vcmp.eq.s32.totalorder %v829, %v33
  %vm870 = vcmp.eq.s32.totalorder %v832, %v33
  %vm871 = vcmp.eq.s32.totalorder %v835, %v33
  %vm872 = vcmp.eq.s32.totalorder %v838, %v33
  %vm873 = vcmp.eq.s32.totalorder %v841, %v33
  %vm874 = vcmp.eq.s32.totalorder %v844, %v33
  %vm875 = vcmp.eq.s32.totalorder %v847, %v33
  %vm876 = vcmp.eq.s32.totalorder %v850, %v33
  %vm877 = vcmp.eq.s32.totalorder %v853, %v33
  %vm878 = vcmp.eq.s32.totalorder %v856, %v33
  %vm879 = vcmp.eq.s32.totalorder %v859, %v33
  %vm880 = vcmp.eq.s32.totalorder %v862, %v33
  %vm881 = vcmp.eq.s32.totalorder %v865, %v33
  %v882 = vsel %vm866, 1, 0
  %v883 = vsel %vm867, 1, 0
  %v884 = vsel %vm868, 1, 0
  %v885 = vsel %vm869, 1, 0
  %v886 = vsel %vm870, 1, 0
  %v887 = vsel %vm871, 1, 0
  %v888 = vsel %vm872, 1, 0
  %v889 = vsel %vm873, 1, 0
  %v890 = vsel %vm874, 1, 0
  %v891 = vsel %vm875, 1, 0
  %v892 = vsel %vm876, 1, 0
  %v893 = vsel %vm877, 1, 0
  %v894 = vsel %vm878, 1, 0
  %v895 = vsel %vm879, 1, 0
  %v896 = vsel %vm880, 1, 0
  %v897 = vsel %vm881, 1, 0
  %v898 = vcvt.s32.f32 %v882
  %v899 = vcvt.s32.f32 %v883
  %v900 = vcvt.s32.f32 %v884
  %v901 = vcvt.s32.f32 %v885
  %v902 = vcvt.s32.f32 %v886
  %v903 = vcvt.s32.f32 %v887
  %v904 = vcvt.s32.f32 %v888
  %v905 = vcvt.s32.f32 %v889
  %v906 = vcvt.s32.f32 %v890
  %v907 = vcvt.s32.f32 %v891
  %v908 = vcvt.s32.f32 %v892
  %v909 = vcvt.s32.f32 %v893
  %v910 = vcvt.s32.f32 %v894
  %v911 = vcvt.s32.f32 %v895
  %v912 = vcvt.s32.f32 %v896
  %v913 = vcvt.s32.f32 %v897
  %v914 = vadd.f32 %v802, %v898
  %v915 = vadd.f32 %v803, %v899
  %v916 = vadd.f32 %v804, %v900
  %v917 = vadd.f32 %v805, %v901
  %v918 = vadd.f32 %v806, %v902
  %v919 = vadd.f32 %v807, %v903
  %v920 = vadd.f32 %v808, %v904
  %v921 = vadd.f32 %v809, %v905
  %v922 = vadd.f32 %v810, %v906
  %v923 = vadd.f32 %v811, %v907
  %v924 = vadd.f32 %v812, %v908
  %v925 = vadd.f32 %v813, %v909
  %v926 = vadd.f32 %v814, %v910
  %v927 = vadd.f32 %v815, %v911
  %v928 = vadd.f32 %v816, %v912
  %v929 = vadd.f32 %v817, %v913
  %v930 = vld [vmem:[%s1] sm:$0x1]
  %v931 = vld [vmem:[#allocation2] sm:$0x1]
  %933 = vset.pattern.permute.xlu0 0
  %934 = vperm.xlu0 %933, %v931
  %v935 = vpop.permute.xlu0 %934
  %v937 = vlaneseq
  %v938 = vshrl.u32 %v937, 7
  %v939 = vsub.s32 0, %v938
  %v940 = vrot.slane %v935, %v939
  %941 = vmatprep.subr.mxu0 0.0
  %942 = vmatpush1.xpose.msra.mxu0 %v914
  %943 = vmatprep.subr.mxu0 0.0
  %944 = vmatpush1.xpose.msra.mxu0 %v915
  %945 = vmatprep.subr.mxu0 0.0
  %946 = vmatpush1.xpose.msra.mxu0 %v916
  %947 = vmatprep.subr.mxu0 0.0
  %948 = vmatpush1.xpose.msra.mxu0 %v917
  %949 = vmatprep.subr.mxu0 0.0
  %950 = vmatpush1.xpose.msra.mxu0 %v918
  %951 = vmatprep.subr.mxu0 0.0
  %952 = vmatpush1.xpose.msra.mxu0 %v919
  %953 = vmatprep.subr.mxu0 0.0
  %954 = vmatpush1.xpose.msra.mxu0 %v920
  %955 = vmatprep.subr.mxu0 0.0
  %956 = vmatpush1.xpose.msra.mxu0 %v921
  %957 = vmatprep.subr.mxu0 0.0
  %958 = vmatpush1.xpose.msra.mxu0 %v922
  %959 = vmatprep.subr.mxu0 0.0
  %960 = vmatpush1.xpose.msra.mxu0 %v923
  %961 = vmatprep.subr.mxu0 0.0
  %962 = vmatpush1.xpose.msra.mxu0 %v924
  %963 = vmatprep.subr.mxu0 0.0
  %964 = vmatpush1.xpose.msra.mxu0 %v925
  %965 = vmatprep.subr.mxu0 0.0
  %966 = vmatpush1.xpose.msra.mxu0 %v926
  %967 = vmatprep.subr.mxu0 0.0
  %968 = vmatpush1.xpose.msra.mxu0 %v927
  %969 = vmatprep.subr.mxu0 0.0
  %970 = vmatpush1.xpose.msra.mxu0 %v928
  %971 = vmatprep.subr.mxu0 0.0
  %972 = vmatpush1.xpose.msra.mxu0 %v929
  %973 = vmatprep.subr.mxu0 0.0
  %974 = vmatpush1.xpose.msra.mxu0 0.0
  %975 = vmatprep.subr.mxu0 0.0
  %976 = vmatpush1.xpose.msra.mxu0 0.0
  %977 = vmatprep.subr.mxu0 0.0
  %978 = vmatpush1.xpose.msra.mxu0 0.0
  %979 = vmatprep.subr.mxu0 0.0
  %980 = vmatpush1.xpose.msra.mxu0 0.0
  %981 = vmatprep.subr.mxu0 0.0
  %982 = vmatpush1.xpose.msra.mxu0 0.0
  %983 = vmatprep.subr.mxu0 0.0
  %984 = vmatpush1.xpose.msra.mxu0 0.0
  %985 = vmatprep.subr.mxu0 0.0
  %986 = vmatpush1.xpose.msra.mxu0 0.0
  %987 = vmatprep.subr.mxu0 0.0
  %988 = vmatpush1.xpose.msra.mxu0 0.0
  %989 = vmatprep.subr.mxu0 0.0
  %990 = vmatpush1.xpose.msra.mxu0 0.0
  %991 = vmatprep.subr.mxu0 0.0
  %992 = vmatpush1.xpose.msra.mxu0 0.0
  %993 = vmatprep.subr.mxu0 0.0
  %994 = vmatpush1.xpose.msra.mxu0 0.0
  %995 = vmatprep.subr.mxu0 0.0
  %996 = vmatpush1.xpose.msra.mxu0 0.0
  %997 = vmatprep.subr.mxu0 0.0
  %998 = vmatpush1.xpose.msra.mxu0 0.0
  %999 = vmatprep.subr.mxu0 0.0
  %1000 = vmatpush1.xpose.msra.mxu0 0.0
  %1001 = vmatprep.subr.mxu0 0.0
  %1002 = vmatpush1.xpose.msra.mxu0 0.0
  %1003 = vmatprep.subr.mxu0 0.0
  %1004 = vmatpush1.xpose.msra.mxu0 0.0
  %1005 = vmatprep.mubr.f32.mxu0 0.0
  %1006 = vmatmul.mubr.f32.gmra.mrb[0].mxu0 %v930
  %v1007 = vpop.f32.mrb[0].mxu0
  %v1008 = vadd.f32 %v940, %v1007
  %v1009 = vpop.f32.mrb[0].mxu0
  %1010 = vdwg.mxu0
  %1011 = vst [vmem:[%s3] sm:$0x1] %v1008
  // Predicated region
  $region14: #{deepsets_forward.3} parent=0 // pred_check
    _
  $region15: #{deepsets_forward.3} parent=0 // pred_check_branch
    %1013 = sbr.rel (0) target = $region17
  $region16: #{deepsets_forward.3} parent=0 // pred_region
    _
  $region17: #{deepsets_forward.3} parent=0 // pred_fallthru
    _
  // Predicated region
  $region18: #{deepsets_forward.3} parent=0 // pred_check
    _
  $region19: #{deepsets_forward.3} parent=0 // pred_check_branch
    %1015 = sbr.rel (0) target = $region21
  $region20: #{deepsets_forward.3} parent=0 // pred_region
    _
  $region21: #{deepsets_forward.3} parent=0 // pred_fallthru
    _

</llo_original>
